<compile_context>
chip_gen: v7x
topology: tpu7x:2x2x1
jax: 0.10.0
libtpu: 0.0.40
codegen_flags: <defaults>
</compile_context>

<pallas_src>
import functools

import jax
import jax.numpy as jnp
from jax.experimental import pallas as pl
from jax.experimental.pallas import tpu as pltpu


def _relu6(x):
    return jnp.clip(x, 0.0, 6.0)


# ------------------------- host-side constants (cached) -------------------------

@functools.lru_cache(maxsize=None)
def _edge_masks(H, W, b_tile):
    """(4, b_tile*H*W) f32 {0,1}: [w-1 valid, w+1 valid, h-1 valid, h+1 valid].

    The masks depend only on the position within an image, so the same pattern is
    tiled across the b_tile images folded into the lane axis; they also zero taps
    that would wrap across image/batch boundaries under the cyclic lane rolls.
    """
    p = jnp.arange(H * W, dtype=jnp.int32)
    h, w = p // W, p % W
    base = jnp.stack([
        (w >= 1), (w <= W - 2), (h >= 1), (h <= H - 2),
    ]).astype(jnp.float32)                                  # (4, H*W)
    return jnp.tile(base, (1, b_tile))


@functools.lru_cache(maxsize=None)
def _col_select(W, stride):
    """(W, Wo) 0/1 matrix selecting the w-strided columns of one image row."""
    Wo = (W - 1) // stride + 1
    w = jnp.arange(W)[:, None]
    wo = jnp.arange(Wo)[None, :]
    return (w == wo * stride).astype(jnp.float32)


def _fold_bn(gamma, beta, mean, var, eps=1e-5):
    scale = gamma / jnp.sqrt(var + eps)
    bias = beta - mean * scale
    return scale, bias


# ------------------------- fused Pallas kernel -------------------------

@functools.lru_cache(maxsize=None)
def _build_fused_call(N, Cin, H, W, hidden, out_ch, stride, expand, residual, b_tile):
    """pallas_call computing the whole InvertedResidual block.

    Layout: channel-major, batch folded into lanes.  The activation is a
    (channels, b_tile*H*W) slab per grid step: channels on sublanes, flattened
    batch x spatial on lanes (lane-dense).
    """
    HW = H * W
    Ho = (H - 1) // stride + 1
    Wo = (W - 1) // stride + 1
    HWo = Ho * Wo
    L = b_tile * HW      # input / hidden lane extent per grid step
    Lo = b_tile * HWo    # output lane extent per grid step
    grid = (N // b_tile,)

    def kernel(*refs):
        i = 0
        x_ref = refs[i]; i += 1
        if expand:
            we_ref, b1_ref = refs[i], refs[i + 1]; i += 2
        wd_ref, b2_ref, m_ref = refs[i], refs[i + 1], refs[i + 2]; i += 3
        cs_ref = None
        if stride > 1:
            cs_ref = refs[i]; i += 1
        wp_ref, b3_ref = refs[i], refs[i + 1]; i += 2
        o_ref = refs[i]; i += 1
        sel_ref = refs[i] if stride > 1 else None

        x = x_ref[...]                                       # (Cin, L) f32

        # --- 1x1 expansion + folded BN + ReLU6 (bf16 MXU, f32 accumulate) ---
        if expand:
            h1 = jnp.dot(we_ref[...], x.astype(jnp.bfloat16),
                         preferred_element_type=jnp.float32)
            h1 = _relu6(h1 + b1_ref[...])                    # (hidden, L) f32
        else:
            h1 = x                                           # hidden == Cin

        # --- depthwise 3x3 + folded BN (VPU + XLU rolls, factored masks) ---
        def shifted(v, off):
            # shifted(v, off)[p] == v[(p + off) mod L]
            return v if off == 0 else pltpu.roll(v, shift=(-off) % L, axis=1)

        cm1 = m_ref[0:1, :]   # tap at w-1 valid
        cp1 = m_ref[1:2, :]   # tap at w+1 valid
        rm1 = m_ref[2:3, :]   # tap at h-1 valid
        rp1 = m_ref[3:4, :]   # tap at h+1 valid
        wd = wd_ref[...]      # (hidden, 9), BN scale folded, tap order (dh+1)*3+(dw+1)

        cols = (shifted(h1, -1) * cm1, h1, shifted(h1, +1) * cp1)
        acc = None
        for gi, dh in enumerate((-1, 0, 1)):
            base = gi * 3
            g = (cols[0] * wd[:, base + 0:base + 1]
                 + cols[1] * wd[:, base + 1:base + 2]
                 + cols[2] * wd[:, base + 2:base + 3])
            g = shifted(g, dh * W)
            if dh == -1:
                g = g * rm1
            elif dh == 1:
                g = g * rp1
            acc = g if acc is None else acc + g              # (hidden, L)

        # --- stride-2: contiguous per-output-row slices + tiny (W, Wo) select matmul ---
        if stride > 1:
            cs = cs_ref[...]                                 # (W, Wo)
            for b in range(b_tile):
                for ho in range(Ho):
                    src = b * HW + (ho * stride) * W
                    dst = (b * Ho + ho) * Wo
                    chunk = acc[:, src:src + W]              # contiguous lane slice
                    sel_ref[:, dst:dst + Wo] = jnp.dot(
                        chunk, cs, preferred_element_type=jnp.float32)
            acc = sel_ref[...]                               # (hidden, Lo)

        h2 = _relu6(acc + b2_ref[...])                       # (hidden, Lo)

        # --- 1x1 projection + folded BN (+ residual) (bf16 MXU, f32 accumulate) ---
        out = jnp.dot(wp_ref[...], h2.astype(jnp.bfloat16),
                      preferred_element_type=jnp.float32) + b3_ref[...]
        if residual:
            out = out + x                                    # stride==1 and Cin==out_ch
        o_ref[...] = out.astype(o_ref.dtype)

    in_specs = [pl.BlockSpec((Cin, L), lambda g: (0, g))]
    if expand:
        in_specs += [pl.BlockSpec((hidden, Cin), lambda g: (0, 0)),
                     pl.BlockSpec((hidden, 1), lambda g: (0, 0))]
    in_specs += [pl.BlockSpec((hidden, 9), lambda g: (0, 0)),
                 pl.BlockSpec((hidden, 1), lambda g: (0, 0)),
                 pl.BlockSpec((4, L), lambda g: (0, 0))]
    if stride > 1:
        in_specs += [pl.BlockSpec((W, Wo), lambda g: (0, 0))]
    in_specs += [pl.BlockSpec((out_ch, hidden), lambda g: (0, 0)),
                 pl.BlockSpec((out_ch, 1), lambda g: (0, 0))]

    scratch = [pltpu.VMEM((hidden, Lo), jnp.float32)] if stride > 1 else []

    return pl.pallas_call(
        kernel,
        out_shape=jax.ShapeDtypeStruct((out_ch, N * HWo), jnp.float32),
        grid=grid,
        in_specs=in_specs,
        out_specs=pl.BlockSpec((out_ch, Lo), lambda g: (0, g)),
        scratch_shapes=scratch,
        compiler_params=pltpu.CompilerParams(dimension_semantics=("parallel",)),
    )


# ------------------------- module -------------------------

class InvertedResidualPallas:
    """Pallas port of torchvision-style InvertedResidual (eval-mode BN), fully fused."""

    def __init__(self, inp, oup, stride, expand_ratio, widen_factor=1.0, key=None):
        assert stride in (1, 2)
        self.inp = inp
        self.stride = stride
        self.hidden = int(round(inp * expand_ratio * widen_factor))
        self.out_ch = int(oup * widen_factor)
        self.expand = expand_ratio != 1
        if not self.expand:
            assert self.hidden == inp, "expand_ratio==1 requires hidden == inp"
        # Same condition as the PyTorch module (inp == oup).
        self.use_res_connect = (stride == 1 and inp == oup)
        if self.use_res_connect:
            assert inp == self.out_ch, "residual needs inp == int(oup * widen_factor)"

        if key is None:
            key = jax.random.PRNGKey(42)
        ks = jax.random.split(key, 6)

        def bn_params(k, c):
            k1, k2, k3, k4 = jax.random.split(k, 4)
            gamma = 0.5 + jax.random.uniform(k1, (c,), jnp.float32)   # > 0
            beta = 0.1 * jax.random.normal(k2, (c,), jnp.float32)
            mean = 0.1 * jax.random.normal(k3, (c,), jnp.float32)
            var = 0.5 + jax.random.uniform(k4, (c,), jnp.float32)     # > 0
            return _fold_bn(gamma, beta, mean, var)

        if self.expand:
            # torch Conv2d weight (hidden, inp, 1, 1) -> (hidden, inp); BN scale folded,
            # stored in bf16 for the MXU fast path.
            self.w1 = 0.2 * jax.random.normal(ks[0], (self.hidden, inp), jnp.float32)
            self.s1, self.b1 = bn_params(ks[1], self.hidden)
            self.we_k = (self.w1 * self.s1[:, None]).astype(jnp.bfloat16)
            self.b1_k = self.b1[:, None]                     # (hidden, 1) f32

        # torch depthwise weight (hidden, 1, 3, 3) -> (hidden, 9); stays f32 (VPU work).
        self.w_dw = 0.2 * jax.random.normal(ks[2], (self.hidden, 3, 3), jnp.float32)
        self.s2, self.b2 = bn_params(ks[3], self.hidden)
        self.wd_k = self.w_dw.reshape(self.hidden, 9) * self.s2[:, None]
        self.b2_k = self.b2[:, None]

        # torch Conv2d weight (out_ch, hidden, 1, 1) -> (out_ch, hidden); bf16.
        self.w_proj = 0.2 * jax.random.normal(ks[4], (self.out_ch, self.hidden), jnp.float32)
        self.s3, self.b3 = bn_params(ks[5], self.out_ch)
        self.wp_k = (self.w_proj * self.s3[:, None]).astype(jnp.bfloat16)
        self.b3_k = self.b3[:, None]

    def __call__(self, x_nchw):
        N, C, H, W = x_nchw.shape
        assert C == self.inp
        HW = H * W
        Ho = (H - 1) // self.stride + 1
        Wo = (W - 1) // self.stride + 1
        HWo = Ho * Wo

        # Smallest divisor of N giving a lane-dense (>=128) output block; keeps the
        # grid extent as large as possible for v7x's two TensorCores.
        b_tile = N
        for d in range(1, N + 1):
            if N % d == 0 and d * HWo >= 128:
                b_tile = d
                break

        # Channel-major with batch folded into lanes (wrapper-side layout plumbing).
        x_flat = x_nchw.astype(jnp.float32).transpose(1, 0, 2, 3).reshape(C, N * HW)

        args = [x_flat]
        if self.expand:
            args += [self.we_k, self.b1_k]
        args += [self.wd_k, self.b2_k, _edge_masks(H, W, b_tile)]
        if self.stride > 1:
            args += [_col_select(W, self.stride)]
        args += [self.wp_k, self.b3_k]

        call = _build_fused_call(N, C, H, W, self.hidden, self.out_ch,
                                 self.stride, self.expand, self.use_res_connect, b_tile)
        out_flat = call(*args)                               # (out_ch, N*HWo)
        return out_flat.reshape(self.out_ch, N, Ho, Wo).transpose(1, 0, 2, 3)


# ------------------------- pure-JAX reference (correctness check) -------------------------

def _reference(mod: InvertedResidualPallas, x_nchw):
    """Mirrors the kernel's precision policy: bf16 inputs to the two 1x1 convs,
    f32 accumulation and all other math in f32 (depthwise, bias, ReLU6, residual)."""
    x = jnp.transpose(x_nchw, (0, 2, 3, 1)).astype(jnp.float32)   # NHWC
    h = x
    if mod.expand:
        e = jnp.einsum('nhwc,dc->nhwd',
                       h.astype(jnp.bfloat16).astype(jnp.float32),
                       mod.we_k.astype(jnp.float32))
        h = _relu6(e + mod.b1)
    N, H, W, C = h.shape
    s = mod.stride
    Ho = (H - 1) // s + 1
    Wo = (W - 1) // s + 1
    hp = jnp.pad(h, ((0, 0), (1, 1), (1, 1), (0, 0)))
    wd = mod.wd_k.reshape(mod.hidden, 3, 3)                   # BN scale already folded
    acc = jnp.zeros((N, Ho, Wo, C), jnp.float32)
    for kh in range(3):
        for kw in range(3):
            tap = hp[:, kh:kh + (Ho - 1) * s + 1:s, kw:kw + (Wo - 1) * s + 1:s, :]
            acc = acc + tap * wd[:, kh, kw]
    h2 = _relu6(acc + mod.b2)
    o = jnp.einsum('nhwc,dc->nhwd',
                   h2.astype(jnp.bfloat16).astype(jnp.float32),
                   mod.wp_k.astype(jnp.float32)) + mod.b3
    if mod.use_res_connect:
        o = o + x
    return jnp.transpose(o, (0, 3, 1, 2))


if __name__ == "__main__":
    key = jax.random.PRNGKey(0)
    k_x, k_p1, k_p2 = jax.random.split(key, 3)

    # NCHW input, like PyTorch.
    x = jax.random.normal(k_x, (2, 4, 16, 16), jnp.float32)

    # Case 1: stride=1, expand_ratio=6 -> hidden=24, residual connection active.
    blk1 = InvertedResidualPallas(inp=4, oup=4, stride=1, expand_ratio=6, key=k_p1)
    out1 = jax.block_until_ready(blk1(x))
    ref1 = _reference(blk1, x)
    assert out1.shape == (2, 4, 16, 16)
    assert jnp.allclose(out1, ref1, atol=2e-3, rtol=2e-3), "stride=1 mismatch vs reference"

    # Case 2: stride=2, no residual, in-kernel strided downsampling.
    blk2 = InvertedResidualPallas(inp=4, oup=8, stride=2, expand_ratio=6, key=k_p2)
    out2 = jax.block_until_ready(blk2(x))
    ref2 = _reference(blk2, x)
    assert out2.shape == (2, 8, 8, 8)
    assert jnp.allclose(out2, ref2, atol=2e-3, rtol=2e-3), "stride=2 mismatch vs reference"

    print("KERNEL_OK")
</pallas_src>

<mosaic_0001>
module attributes {stable_mosaic.version = 11 : i64} {
  func.func @kernel(%arg0: i32, %arg1: memref<4x256xf32, #tpu.memory_space<vmem>>, %arg2: memref<24x4xbf16, #tpu.memory_space<vmem>>, %arg3: memref<24x1xf32, #tpu.memory_space<vmem>>, %arg4: memref<24x9xf32, #tpu.memory_space<vmem>>, %arg5: memref<24x1xf32, #tpu.memory_space<vmem>>, %arg6: memref<4x256xf32, #tpu.memory_space<vmem>>, %arg7: memref<4x24xbf16, #tpu.memory_space<vmem>>, %arg8: memref<4x1xf32, #tpu.memory_space<vmem>>, %arg9: memref<4x256xf32, #tpu.memory_space<vmem>>) attributes {dimension_semantics = [#tpu.dimension_semantics<parallel>], iteration_bounds = array<i64: 2>, scalar_prefetch = 0 : i64, scratch_operands = 0 : i64, tpu.core_type = #tpu.core_type<tc>, window_params = [{transform_indices = @transform_0, window_bounds = array<i64: 4, 256>}, {pipeline_mode = #tpu.pipeline_mode<synchronous>, transform_indices = @transform_1, window_bounds = array<i64: 24, 4>}, {pipeline_mode = #tpu.pipeline_mode<synchronous>, transform_indices = @transform_2, window_bounds = array<i64: 24, 1>}, {pipeline_mode = #tpu.pipeline_mode<synchronous>, transform_indices = @transform_3, window_bounds = array<i64: 24, 9>}, {pipeline_mode = #tpu.pipeline_mode<synchronous>, transform_indices = @transform_4, window_bounds = array<i64: 24, 1>}, {pipeline_mode = #tpu.pipeline_mode<synchronous>, transform_indices = @transform_5, window_bounds = array<i64: 4, 256>}, {pipeline_mode = #tpu.pipeline_mode<synchronous>, transform_indices = @transform_6, window_bounds = array<i64: 4, 24>}, {pipeline_mode = #tpu.pipeline_mode<synchronous>, transform_indices = @transform_7, window_bounds = array<i64: 4, 1>}, {transform_indices = @transform_8, window_bounds = array<i64: 4, 256>}]} {
    %c0 = arith.constant 0 : index
    %c0_0 = arith.constant 0 : index
    %0 = vector.load %arg1[%c0, %c0_0] : memref<4x256xf32, #tpu.memory_space<vmem>>, vector<4x256xf32>
    %c0_1 = arith.constant 0 : index
    %c0_2 = arith.constant 0 : index
    %1 = vector.load %arg2[%c0_1, %c0_2] : memref<24x4xbf16, #tpu.memory_space<vmem>>, vector<24x4xbf16>
    %2 = arith.truncf %0 : vector<4x256xf32> to vector<4x256xbf16>
    %cst = arith.constant dense<0.000000e+00> : vector<24x256xf32>
    %3 = tpu.matmul %1, %2, %cst {dimension_numbers = #tpu.dot_dimension_numbers<[1], [0], [0], [1], [0, 0, 1, 1], [], []>} : vector<24x4xbf16>, vector<4x256xbf16>, vector<24x256xf32> -> vector<24x256xf32>
    %c0_3 = arith.constant 0 : index
    %c0_4 = arith.constant 0 : index
    %4 = vector.load %arg3[%c0_3, %c0_4] : memref<24x1xf32, #tpu.memory_space<vmem>>, vector<24x1xf32>
    %5 = vector.broadcast %4 : vector<24x1xf32> to vector<24x256xf32>
    %6 = arith.addf %3, %5 : vector<24x256xf32>
    %cst_5 = arith.constant 0.000000e+00 : f32
    %cst_6 = arith.constant 6.000000e+00 : f32
    %7 = vector.broadcast %cst_5 : f32 to vector<24x256xf32>
    %8 = arith.maximumf %7, %6 : vector<24x256xf32>
    %9 = vector.broadcast %cst_6 : f32 to vector<24x256xf32>
    %10 = arith.minimumf %9, %8 : vector<24x256xf32>
    %c0_7 = arith.constant 0 : index
    %c0_8 = arith.constant 0 : index
    %11 = vector.load %arg6[%c0_7, %c0_8] : memref<4x256xf32, #tpu.memory_space<vmem>>, vector<1x256xf32>
    %c1 = arith.constant 1 : index
    %c0_9 = arith.constant 0 : index
    %12 = vector.load %arg6[%c1, %c0_9] : memref<4x256xf32, #tpu.memory_space<vmem>>, vector<1x256xf32>
    %c2 = arith.constant 2 : index
    %c0_10 = arith.constant 0 : index
    %13 = vector.load %arg6[%c2, %c0_10] : memref<4x256xf32, #tpu.memory_space<vmem>>, vector<1x256xf32>
    %c3 = arith.constant 3 : index
    %c0_11 = arith.constant 0 : index
    %14 = vector.load %arg6[%c3, %c0_11] : memref<4x256xf32, #tpu.memory_space<vmem>>, vector<1x256xf32>
    %c0_12 = arith.constant 0 : index
    %c0_13 = arith.constant 0 : index
    %15 = vector.load %arg4[%c0_12, %c0_13] : memref<24x9xf32, #tpu.memory_space<vmem>>, vector<24x9xf32>
    %c1_i32 = arith.constant 1 : i32
    %16 = tpu.dynamic_rotate %10 by %c1_i32 dim 1 : vector<24x256xf32>, i32 -> vector<24x256xf32>
    %17 = vector.broadcast %11 : vector<1x256xf32> to vector<24x256xf32>
    %18 = arith.mulf %16, %17 : vector<24x256xf32>
    %c255_i32 = arith.constant 255 : i32
    %19 = tpu.dynamic_rotate %10 by %c255_i32 dim 1 : vector<24x256xf32>, i32 -> vector<24x256xf32>
    %20 = vector.broadcast %12 : vector<1x256xf32> to vector<24x256xf32>
    %21 = arith.mulf %19, %20 : vector<24x256xf32>
    %22 = vector.extract_strided_slice %15 {offsets = [0, 0], sizes = [24, 1], strides = [1, 1]} : vector<24x9xf32> to vector<24x1xf32>
    %23 = vector.broadcast %22 : vector<24x1xf32> to vector<24x256xf32>
    %24 = arith.mulf %18, %23 : vector<24x256xf32>
    %25 = vector.extract_strided_slice %15 {offsets = [0, 1], sizes = [24, 1], strides = [1, 1]} : vector<24x9xf32> to vector<24x1xf32>
    %26 = vector.broadcast %25 : vector<24x1xf32> to vector<24x256xf32>
    %27 = arith.mulf %10, %26 : vector<24x256xf32>
    %28 = arith.addf %24, %27 : vector<24x256xf32>
    %29 = vector.extract_strided_slice %15 {offsets = [0, 2], sizes = [24, 1], strides = [1, 1]} : vector<24x9xf32> to vector<24x1xf32>
    %30 = vector.broadcast %29 : vector<24x1xf32> to vector<24x256xf32>
    %31 = arith.mulf %21, %30 : vector<24x256xf32>
    %32 = arith.addf %28, %31 : vector<24x256xf32>
    %c16_i32 = arith.constant 16 : i32
    %33 = tpu.dynamic_rotate %32 by %c16_i32 dim 1 : vector<24x256xf32>, i32 -> vector<24x256xf32>
    %34 = vector.broadcast %13 : vector<1x256xf32> to vector<24x256xf32>
    %35 = arith.mulf %33, %34 : vector<24x256xf32>
    %36 = vector.extract_strided_slice %15 {offsets = [0, 3], sizes = [24, 1], strides = [1, 1]} : vector<24x9xf32> to vector<24x1xf32>
    %37 = vector.broadcast %36 : vector<24x1xf32> to vector<24x256xf32>
    %38 = arith.mulf %18, %37 : vector<24x256xf32>
    %39 = vector.extract_strided_slice %15 {offsets = [0, 4], sizes = [24, 1], strides = [1, 1]} : vector<24x9xf32> to vector<24x1xf32>
    %40 = vector.broadcast %39 : vector<24x1xf32> to vector<24x256xf32>
    %41 = arith.mulf %10, %40 : vector<24x256xf32>
    %42 = arith.addf %38, %41 : vector<24x256xf32>
    %43 = vector.extract_strided_slice %15 {offsets = [0, 5], sizes = [24, 1], strides = [1, 1]} : vector<24x9xf32> to vector<24x1xf32>
    %44 = vector.broadcast %43 : vector<24x1xf32> to vector<24x256xf32>
    %45 = arith.mulf %21, %44 : vector<24x256xf32>
    %46 = arith.addf %42, %45 : vector<24x256xf32>
    %47 = arith.addf %35, %46 : vector<24x256xf32>
    %48 = vector.extract_strided_slice %15 {offsets = [0, 6], sizes = [24, 1], strides = [1, 1]} : vector<24x9xf32> to vector<24x1xf32>
    %49 = vector.broadcast %48 : vector<24x1xf32> to vector<24x256xf32>
    %50 = arith.mulf %18, %49 : vector<24x256xf32>
    %51 = vector.extract_strided_slice %15 {offsets = [0, 7], sizes = [24, 1], strides = [1, 1]} : vector<24x9xf32> to vector<24x1xf32>
    %52 = vector.broadcast %51 : vector<24x1xf32> to vector<24x256xf32>
    %53 = arith.mulf %10, %52 : vector<24x256xf32>
    %54 = arith.addf %50, %53 : vector<24x256xf32>
    %55 = vector.extract_strided_slice %15 {offsets = [0, 8], sizes = [24, 1], strides = [1, 1]} : vector<24x9xf32> to vector<24x1xf32>
    %56 = vector.broadcast %55 : vector<24x1xf32> to vector<24x256xf32>
    %57 = arith.mulf %21, %56 : vector<24x256xf32>
    %58 = arith.addf %54, %57 : vector<24x256xf32>
    %c240_i32 = arith.constant 240 : i32
    %59 = tpu.dynamic_rotate %58 by %c240_i32 dim 1 : vector<24x256xf32>, i32 -> vector<24x256xf32>
    %60 = vector.broadcast %14 : vector<1x256xf32> to vector<24x256xf32>
    %61 = arith.mulf %59, %60 : vector<24x256xf32>
    %62 = arith.addf %47, %61 : vector<24x256xf32>
    %c0_14 = arith.constant 0 : index
    %c0_15 = arith.constant 0 : index
    %63 = vector.load %arg5[%c0_14, %c0_15] : memref<24x1xf32, #tpu.memory_space<vmem>>, vector<24x1xf32>
    %64 = vector.broadcast %63 : vector<24x1xf32> to vector<24x256xf32>
    %65 = arith.addf %62, %64 : vector<24x256xf32>
    %cst_16 = arith.constant 0.000000e+00 : f32
    %cst_17 = arith.constant 6.000000e+00 : f32
    %66 = vector.broadcast %cst_16 : f32 to vector<24x256xf32>
    %67 = arith.maximumf %66, %65 : vector<24x256xf32>
    %68 = vector.broadcast %cst_17 : f32 to vector<24x256xf32>
    %69 = arith.minimumf %68, %67 : vector<24x256xf32>
    %c0_18 = arith.constant 0 : index
    %c0_19 = arith.constant 0 : index
    %70 = vector.load %arg7[%c0_18, %c0_19] : memref<4x24xbf16, #tpu.memory_space<vmem>>, vector<4x24xbf16>
    %71 = arith.truncf %69 : vector<24x256xf32> to vector<24x256xbf16>
    %cst_20 = arith.constant dense<0.000000e+00> : vector<4x256xf32>
    %72 = tpu.matmul %70, %71, %cst_20 {dimension_numbers = #tpu.dot_dimension_numbers<[1], [0], [0], [1], [0, 0, 1, 1], [], []>} : vector<4x24xbf16>, vector<24x256xbf16>, vector<4x256xf32> -> vector<4x256xf32>
    %c0_21 = arith.constant 0 : index
    %c0_22 = arith.constant 0 : index
    %73 = vector.load %arg8[%c0_21, %c0_22] : memref<4x1xf32, #tpu.memory_space<vmem>>, vector<4x1xf32>
    %74 = vector.broadcast %73 : vector<4x1xf32> to vector<4x256xf32>
    %75 = arith.addf %72, %74 : vector<4x256xf32>
    %76 = arith.addf %75, %0 : vector<4x256xf32>
    %c0_23 = arith.constant 0 : index
    %c0_24 = arith.constant 0 : index
    %77 = vector.load %arg9[%c0_23, %c0_24] : memref<4x256xf32, #tpu.memory_space<vmem>>, vector<4x256xf32>
    tpu.vector_store %arg9[%c0_23, %c0_24], %76 {strides = array<i32>} : memref<4x256xf32, #tpu.memory_space<vmem>>, vector<4x256xf32>,
    return
  }
  func.func @transform_0(%arg0: i32) -> (i32, i32) {
    %c0_i32 = arith.constant 0 : i32
    %c0_i32_0 = arith.constant 0 : i32
    return %c0_i32, %arg0 : i32, i32
  }
  func.func @transform_1(%arg0: i32) -> (i32, i32) {
    %c0_i32 = arith.constant 0 : i32
    %c0_i32_0 = arith.constant 0 : i32
    %c0_i32_1 = arith.constant 0 : i32
    return %c0_i32, %c0_i32_0 : i32, i32
  }
  func.func @transform_2(%arg0: i32) -> (i32, i32) {
    %c0_i32 = arith.constant 0 : i32
    %c0_i32_0 = arith.constant 0 : i32
    %c0_i32_1 = arith.constant 0 : i32
    return %c0_i32, %c0_i32_0 : i32, i32
  }
  func.func @transform_3(%arg0: i32) -> (i32, i32) {
    %c0_i32 = arith.constant 0 : i32
    %c0_i32_0 = arith.constant 0 : i32
    %c0_i32_1 = arith.constant 0 : i32
    return %c0_i32, %c0_i32_0 : i32, i32
  }
  func.func @transform_4(%arg0: i32) -> (i32, i32) {
    %c0_i32 = arith.constant 0 : i32
    %c0_i32_0 = arith.constant 0 : i32
    %c0_i32_1 = arith.constant 0 : i32
    return %c0_i32, %c0_i32_0 : i32, i32
  }
  func.func @transform_5(%arg0: i32) -> (i32, i32) {
    %c0_i32 = arith.constant 0 : i32
    %c0_i32_0 = arith.constant 0 : i32
    %c0_i32_1 = arith.constant 0 : i32
    return %c0_i32, %c0_i32_0 : i32, i32
  }
  func.func @transform_6(%arg0: i32) -> (i32, i32) {
    %c0_i32 = arith.constant 0 : i32
    %c0_i32_0 = arith.constant 0 : i32
    %c0_i32_1 = arith.constant 0 : i32
    return %c0_i32, %c0_i32_0 : i32, i32
  }
  func.func @transform_7(%arg0: i32) -> (i32, i32) {
    %c0_i32 = arith.constant 0 : i32
    %c0_i32_0 = arith.constant 0 : i32
    %c0_i32_1 = arith.constant 0 : i32
    return %c0_i32, %c0_i32_0 : i32, i32
  }
  func.func @transform_8(%arg0: i32) -> (i32, i32) {
    %c0_i32 = arith.constant 0 : i32
    %c0_i32_0 = arith.constant 0 : i32
    return %c0_i32, %arg0 : i32, i32
  }
}

</mosaic_0001>

<llo_original>
// kernel: tpu_custom_call.1
$region0: #{tpu_custom_call.1}
  #allocation0 [shape = 'u32[]', space=smem, size = 0x4, offset = 0x4, fixed_abs, tag = 'smem constant byte address 0x4 - core index']
  #allocation1 [shape = 'u32[144,128]{1,0:T(1,128)}', space=vmem, size = 0x12000, scoped, tag = 'internal scratch']
  %s0 = inlined_call_operand.vmem [shape: f32[4,512], index: 0, kind: input, shape index: {}]
  %s1 = inlined_call_operand.vmem [shape: bf16[24,4], index: 1, kind: input, shape index: {}]
  %s2 = inlined_call_operand.vmem [shape: f32[24,1], index: 2, kind: input, shape index: {}]
  %s3 = inlined_call_operand.vmem [shape: f32[24,9], index: 3, kind: input, shape index: {}]
  %s4 = inlined_call_operand.vmem [shape: f32[24,1], index: 4, kind: input, shape index: {}]
  %s5 = inlined_call_operand.vmem [shape: f32[4,256], index: 5, kind: input, shape index: {}]
  %s6 = inlined_call_operand.vmem [shape: bf16[4,24], index: 6, kind: input, shape index: {}]
  %s7 = inlined_call_operand.vmem [shape: f32[4,1], index: 7, kind: input, shape index: {}]
  %s8 = inlined_call_operand.hbm [shape: f32[4,512], index: 8, kind: output, shape index: {}]
  %s9 = sld [smem:[#allocation0]]
  $region65: #{tpu_custom_call.1} parent=0
    _
  %s11 = ssub.s32 1, %s9
  %s12 = scalar_select 0, %s11, %s9
  $region1: #{tpu_custom_call.1} parent=0
    #allocation2 [shape = 'u8[8192]{0}', space=vmem, size = 0x2000, scoped, tag = 'output window, operand 0']
    #allocation3 [shape = 's32[2]{0}', space=sflag, size = 0x8, scoped, tag = 'scoped memory for tpu_custom_call.1']
    %13 = vsyncpa [#allocation3], 0
    %s14 = scalar_lea.sflag [#allocation3], 1
    %15 = vsyncpa %s14, 0
    loop: start=0, step=1, limit=4
    $region2: #{tpu_custom_call.1} parent=1 // loop_pre_header
      _
    $region3: #{tpu_custom_call.1} parent=1 // loop_header
      %s17 = sphi 0, %s21
      %p18 = scmp.ge.s32.totalorder %s17, 4
      %s27 = sphi 0, %s29
      %s30 = sphi 0, %s27
      %s31 = sphi 0, %s30
      %s47 = sphi 0, %s31
      %s51 = sphi 0, %s51
      %s53 = sphi 0, %s51
      %s54 = sphi 0, %s53
      %s68 = sphi 0, %s54
      %s72 = sphi 0, %s72
      %s74 = sphi 0, %s72
      %s75 = sphi 0, %s74
      %s89 = sphi 0, %s75
      %s93 = sphi 0, %s93
      %s95 = sphi 0, %s93
      %s96 = sphi 0, %s95
      %s110 = sphi 0, %s96
      %s114 = sphi 0, %s114
      %s116 = sphi 0, %s114
      %s117 = sphi 0, %s116
      %s131 = sphi 0, %s117
      %s135 = sphi 0, %s135
      %s137 = sphi 0, %s135
      %s138 = sphi 0, %s137
      %s152 = sphi 0, %s138
      %s156 = sphi 0, %s156
      %s158 = sphi 0, %s156
      %s159 = sphi 0, %s158
      %s173 = sphi 0, %s159
      %s177 = sphi 0, %s177
      %s179 = sphi 0, %s177
      %s180 = sphi 0, %s179
      %s194 = sphi 0, %s180
      %s200 = sphi 0, %s202
      %s203 = sphi 0, %s200
      %s204 = sphi 0, %s203
      %s220 = sphi 0, %s204
    $region4: #{tpu_custom_call.1} parent=1 // loop_header_branch
      %20 = sbr.rel (%p18) target = $region8
    $region5: #{tpu_custom_call.1} parent=1 // loop_body
      %s22 = ssub.s32 %s17, 1
      %s23 = ssub.s32 %s17, 2
      %s24 = sadd.s32 %s17, 1
      %s25 = ssub.s32 %s17, %s24
      %p26 = scmp.eq.s32.totalorder %s25, 0
      %s28 = sadd.s32 %s27, 1
      %s29 = scalar_select %p26, %s27, %s28
      %p32 = pneg %p26
      %p33 = scmp.eq.s32.totalorder %s17, 1
      %p34 = por %p32, %p33
      %p35 = scmp.ne.s32.totalorder %s27, %s30
      %p36 = scmp.eq.s32.totalorder %s17, 0
      %p37 = por %p35, %p36
      %p38 = scmp.ne.s32.totalorder %s27, %s30
      %p39 = scmp.eq.s32.totalorder %s22, 1
      %p40 = por %p38, %p39
      %p41 = scmp.ne.s32.totalorder %s30, %s31
      %p42 = scmp.eq.s32.totalorder %s22, 0
      %p43 = por %p41, %p42
      %p44 = scmp.ne.s32.totalorder %s30, %s31
      %p45 = scmp.eq.s32.totalorder %s23, 1
      %p46 = por %p44, %p45
      %p48 = scmp.ne.s32.totalorder %s31, %s47
      %p49 = scmp.eq.s32.totalorder %s23, 0
      %p50 = por %p48, %p49
      %s52 = sadd.s32 %s51, 1
      %p55 = scmp.eq.s32.totalorder %s17, 1
      %p56 = scmp.ne.s32.totalorder %s51, %s53
      %p57 = scmp.eq.s32.totalorder %s17, 0
      %p58 = por %p56, %p57
      %p59 = scmp.ne.s32.totalorder %s51, %s53
      %p60 = scmp.eq.s32.totalorder %s22, 1
      %p61 = por %p59, %p60
      %p62 = scmp.ne.s32.totalorder %s53, %s54
      %p63 = scmp.eq.s32.totalorder %s22, 0
      %p64 = por %p62, %p63
      %p65 = scmp.ne.s32.totalorder %s53, %s54
      %p66 = scmp.eq.s32.totalorder %s23, 1
      %p67 = por %p65, %p66
      %p69 = scmp.ne.s32.totalorder %s54, %s68
      %p70 = scmp.eq.s32.totalorder %s23, 0
      %p71 = por %p69, %p70
      %s73 = sadd.s32 %s72, 1
      %p76 = scmp.eq.s32.totalorder %s17, 1
      %p77 = scmp.ne.s32.totalorder %s72, %s74
      %p78 = scmp.eq.s32.totalorder %s17, 0
      %p79 = por %p77, %p78
      %p80 = scmp.ne.s32.totalorder %s72, %s74
      %p81 = scmp.eq.s32.totalorder %s22, 1
      %p82 = por %p80, %p81
      %p83 = scmp.ne.s32.totalorder %s74, %s75
      %p84 = scmp.eq.s32.totalorder %s22, 0
      %p85 = por %p83, %p84
      %p86 = scmp.ne.s32.totalorder %s74, %s75
      %p87 = scmp.eq.s32.totalorder %s23, 1
      %p88 = por %p86, %p87
      %p90 = scmp.ne.s32.totalorder %s75, %s89
      %p91 = scmp.eq.s32.totalorder %s23, 0
      %p92 = por %p90, %p91
      %s94 = sadd.s32 %s93, 1
      %p97 = scmp.eq.s32.totalorder %s17, 1
      %p98 = scmp.ne.s32.totalorder %s93, %s95
      %p99 = scmp.eq.s32.totalorder %s17, 0
      %p100 = por %p98, %p99
      %p101 = scmp.ne.s32.totalorder %s93, %s95
      %p102 = scmp.eq.s32.totalorder %s22, 1
      %p103 = por %p101, %p102
      %p104 = scmp.ne.s32.totalorder %s95, %s96
      %p105 = scmp.eq.s32.totalorder %s22, 0
      %p106 = por %p104, %p105
      %p107 = scmp.ne.s32.totalorder %s95, %s96
      %p108 = scmp.eq.s32.totalorder %s23, 1
      %p109 = por %p107, %p108
      %p111 = scmp.ne.s32.totalorder %s96, %s110
      %p112 = scmp.eq.s32.totalorder %s23, 0
      %p113 = por %p111, %p112
      %s115 = sadd.s32 %s114, 1
      %p118 = scmp.eq.s32.totalorder %s17, 1
      %p119 = scmp.ne.s32.totalorder %s114, %s116
      %p120 = scmp.eq.s32.totalorder %s17, 0
      %p121 = por %p119, %p120
      %p122 = scmp.ne.s32.totalorder %s114, %s116
      %p123 = scmp.eq.s32.totalorder %s22, 1
      %p124 = por %p122, %p123
      %p125 = scmp.ne.s32.totalorder %s116, %s117
      %p126 = scmp.eq.s32.totalorder %s22, 0
      %p127 = por %p125, %p126
      %p128 = scmp.ne.s32.totalorder %s116, %s117
      %p129 = scmp.eq.s32.totalorder %s23, 1
      %p130 = por %p128, %p129
      %p132 = scmp.ne.s32.totalorder %s117, %s131
      %p133 = scmp.eq.s32.totalorder %s23, 0
      %p134 = por %p132, %p133
      %s136 = sadd.s32 %s135, 1
      %p139 = scmp.eq.s32.totalorder %s17, 1
      %p140 = scmp.ne.s32.totalorder %s135, %s137
      %p141 = scmp.eq.s32.totalorder %s17, 0
      %p142 = por %p140, %p141
      %p143 = scmp.ne.s32.totalorder %s135, %s137
      %p144 = scmp.eq.s32.totalorder %s22, 1
      %p145 = por %p143, %p144
      %p146 = scmp.ne.s32.totalorder %s137, %s138
      %p147 = scmp.eq.s32.totalorder %s22, 0
      %p148 = por %p146, %p147
      %p149 = scmp.ne.s32.totalorder %s137, %s138
      %p150 = scmp.eq.s32.totalorder %s23, 1
      %p151 = por %p149, %p150
      %p153 = scmp.ne.s32.totalorder %s138, %s152
      %p154 = scmp.eq.s32.totalorder %s23, 0
      %p155 = por %p153, %p154
      %s157 = sadd.s32 %s156, 1
      %p160 = scmp.eq.s32.totalorder %s17, 1
      %p161 = scmp.ne.s32.totalorder %s156, %s158
      %p162 = scmp.eq.s32.totalorder %s17, 0
      %p163 = por %p161, %p162
      %p164 = scmp.ne.s32.totalorder %s156, %s158
      %p165 = scmp.eq.s32.totalorder %s22, 1
      %p166 = por %p164, %p165
      %p167 = scmp.ne.s32.totalorder %s158, %s159
      %p168 = scmp.eq.s32.totalorder %s22, 0
      %p169 = por %p167, %p168
      %p170 = scmp.ne.s32.totalorder %s158, %s159
      %p171 = scmp.eq.s32.totalorder %s23, 1
      %p172 = por %p170, %p171
      %p174 = scmp.ne.s32.totalorder %s159, %s173
      %p175 = scmp.eq.s32.totalorder %s23, 0
      %p176 = por %p174, %p175
      %s178 = sadd.s32 %s177, 1
      %p181 = scmp.eq.s32.totalorder %s17, 1
      %p182 = scmp.ne.s32.totalorder %s177, %s179
      %p183 = scmp.eq.s32.totalorder %s17, 0
      %p184 = por %p182, %p183
      %p185 = scmp.ne.s32.totalorder %s177, %s179
      %p186 = scmp.eq.s32.totalorder %s22, 1
      %p187 = por %p185, %p186
      %p188 = scmp.ne.s32.totalorder %s179, %s180
      %p189 = scmp.eq.s32.totalorder %s22, 0
      %p190 = por %p188, %p189
      %p191 = scmp.ne.s32.totalorder %s179, %s180
      %p192 = scmp.eq.s32.totalorder %s23, 1
      %p193 = por %p191, %p192
      %p195 = scmp.ne.s32.totalorder %s180, %s194
      %p196 = scmp.eq.s32.totalorder %s23, 0
      %p197 = por %p195, %p196
      %s198 = ssub.s32 %s17, %s24
      %p199 = scmp.eq.s32.totalorder %s198, 0
      %s201 = sadd.s32 %s200, 1
      %s202 = scalar_select %p199, %s200, %s201
      %p205 = pneg %p199
      %p206 = scmp.eq.s32.totalorder %s17, 1
      %p207 = por %p205, %p206
      %p208 = scmp.ne.s32.totalorder %s200, %s203
      %p209 = scmp.eq.s32.totalorder %s17, 0
      %p210 = por %p208, %p209
      %p211 = scmp.ne.s32.totalorder %s200, %s203
      %p212 = scmp.eq.s32.totalorder %s22, 1
      %p213 = por %p211, %p212
      %p214 = scmp.ne.s32.totalorder %s203, %s204
      %p215 = scmp.eq.s32.totalorder %s22, 0
      %p216 = por %p214, %p215
      %p217 = scmp.ne.s32.totalorder %s203, %s204
      %p218 = scmp.eq.s32.totalorder %s23, 1
      %p219 = por %p217, %p218
      %p221 = scmp.ne.s32.totalorder %s204, %s220
      %p222 = scmp.eq.s32.totalorder %s23, 0
      %p223 = por %p221, %p222
      %p224 = scmp.le.s32.totalorder 1, %s17
      %p225 = scmp.lt.s32.totalorder %s17, 3
      %p226 = pnand %p224, %p225
      %p227 = pneg %p226
      // Predicated region
      $region9: #{tpu_custom_call.1} parent=5 // pred_check
        _
      $region10: #{tpu_custom_call.1} parent=5 // pred_check_branch
        %229 = sbr.rel (%p226) target = $region12
      $region11: #{tpu_custom_call.1} parent=5 // pred_region
        %s230 = ssub.s32 %s17, 1
        // Predicated region
        $region13: #{tpu_custom_call.1} parent=11 // pred_check
          %p231 = pneg %p64
        $region14: #{tpu_custom_call.1} parent=11 // pred_check_branch
          %233 = sbr.rel (%p231) target = $region16
        $region15: #{tpu_custom_call.1} parent=11 // pred_region
          _
        $region16: #{tpu_custom_call.1} parent=11 // pred_fallthru
          _
        // Predicated region
        $region17: #{tpu_custom_call.1} parent=11 // pred_check
          %p234 = pneg %p85
        $region18: #{tpu_custom_call.1} parent=11 // pred_check_branch
          %236 = sbr.rel (%p234) target = $region20
        $region19: #{tpu_custom_call.1} parent=11 // pred_region
          _
        $region20: #{tpu_custom_call.1} parent=11 // pred_fallthru
          _
        // Predicated region
        $region21: #{tpu_custom_call.1} parent=11 // pred_check
          %p237 = pneg %p106
        $region22: #{tpu_custom_call.1} parent=11 // pred_check_branch
          %239 = sbr.rel (%p237) target = $region24
        $region23: #{tpu_custom_call.1} parent=11 // pred_region
          _
        $region24: #{tpu_custom_call.1} parent=11 // pred_fallthru
          _
        // Predicated region
        $region25: #{tpu_custom_call.1} parent=11 // pred_check
          %p240 = pneg %p127
        $region26: #{tpu_custom_call.1} parent=11 // pred_check_branch
          %242 = sbr.rel (%p240) target = $region28
        $region27: #{tpu_custom_call.1} parent=11 // pred_region
          _
        $region28: #{tpu_custom_call.1} parent=11 // pred_fallthru
          _
        // Predicated region
        $region29: #{tpu_custom_call.1} parent=11 // pred_check
          %p243 = pneg %p148
        $region30: #{tpu_custom_call.1} parent=11 // pred_check_branch
          %245 = sbr.rel (%p243) target = $region32
        $region31: #{tpu_custom_call.1} parent=11 // pred_region
          _
        $region32: #{tpu_custom_call.1} parent=11 // pred_fallthru
          _
        // Predicated region
        $region33: #{tpu_custom_call.1} parent=11 // pred_check
          %p246 = pneg %p169
        $region34: #{tpu_custom_call.1} parent=11 // pred_check_branch
          %248 = sbr.rel (%p246) target = $region36
        $region35: #{tpu_custom_call.1} parent=11 // pred_region
          _
        $region36: #{tpu_custom_call.1} parent=11 // pred_fallthru
          _
        // Predicated region
        $region37: #{tpu_custom_call.1} parent=11 // pred_check
          %p249 = pneg %p190
        $region38: #{tpu_custom_call.1} parent=11 // pred_check_branch
          %251 = sbr.rel (%p249) target = $region40
        $region39: #{tpu_custom_call.1} parent=11 // pred_region
          _
        $region40: #{tpu_custom_call.1} parent=11 // pred_fallthru
          _
      $region12: #{tpu_custom_call.1} parent=5 // pred_fallthru
        _
      %p252 = scmp.lt.s32.totalorder %s17, 2
      // Predicated region
      $region41: #{tpu_custom_call.1} parent=5 // pred_check
        %p253 = pneg %p252
      $region42: #{tpu_custom_call.1} parent=5 // pred_check_branch
        %255 = sbr.rel (%p253) target = $region44
      $region43: #{tpu_custom_call.1} parent=5 // pred_region
        // Predicated region
        $region45: #{tpu_custom_call.1} parent=43 // pred_check
          %p256 = pneg %p37
        $region46: #{tpu_custom_call.1} parent=43 // pred_check_branch
          %258 = sbr.rel (%p256) target = $region48
        $region47: #{tpu_custom_call.1} parent=43 // pred_region
          %s259 = smul.u32 2, %s17
          %p260 = scmp.lt.s32.totalorder %s259, 3
          %s261 = scalar_select %p260, %s259, 3
          %s262 = smul.addr %s261, 4
          %s263 = scalar_lea.vmem %s0, %s262
          %s264 = smul.u32 2, %s17
        $region48: #{tpu_custom_call.1} parent=43 // pred_fallthru
          _
      $region44: #{tpu_custom_call.1} parent=5 // pred_fallthru
        _
      %p265 = scmp.le.s32.totalorder 1, %s17
      %p266 = scmp.lt.s32.totalorder %s17, 3
      %p267 = pnand %p265, %p266
      %p268 = pneg %p267
      // Predicated region
      $region49: #{tpu_custom_call.1} parent=5 // pred_check
        _
      $region50: #{tpu_custom_call.1} parent=5 // pred_check_branch
        %270 = sbr.rel (%p267) target = $region52
      $region51: #{tpu_custom_call.1} parent=5 // pred_region
        %s271 = ssub.s32 %s17, 1
        %s272 = smul.u32 2, %s22
        %p273 = scmp.lt.s32.totalorder %s272, 3
        %s274 = scalar_select %p273, %s272, 3
        %s275 = smul.addr %s274, 4
        %s276 = scalar_lea.vmem %s0, %s275
        %p277 = pneg %p43
        %p278 = pneg %p40
        %p279 = pneg %p64
        %p280 = pneg %p61
        %p281 = pneg %p85
        %p282 = pneg %p82
        %p283 = pneg %p106
        %p284 = pneg %p103
        %p285 = pneg %p127
        %p286 = pneg %p124
        %p287 = pneg %p148
        %p288 = pneg %p145
        %p289 = pneg %p169
        %p290 = pneg %p166
        %p291 = pneg %p190
        %p292 = pneg %p187
        %p293 = pneg %p216
        %p294 = pneg %p213
        %s295 = sand.u32 %s203, 1
        %s296 = scalar_lea.sflag [#allocation3], %s295
        %s297 = sand.u32 %s203, 1
        %s298 = smul.addr %s297, 8
        %s299 = scalar_lea.vmem [#allocation2], %s298
        %s300 = smul.u32 2, %s22
        %p301 = scmp.lt.s32.totalorder %s300, 3
        %s302 = scalar_select %p301, %s300, 3
        %s303 = smul.addr %s302, 4
        %s304 = scalar_lea.vmem %s0, %s303
        %s305 = smul.u32 2, %s22
        %s306 = smul.u32 2, %s22
        %v308 = vld [vmem:[%s304] sm:$0xff]
        %v309 = vld [vmem:[%s1] sm:$0xf]
        %v310 = vld [vmem:[%s1 + $0x4] sm:$0xf]
        %v311 = vld [vmem:[%s1 + $0x8] sm:$0xf]
        %v313 = vcombine.high %v308, %v308
        %v315 = vpack.c.bf16 %v308, %v308
        %v316 = vpack.c.bf16 %v313, %v313
        %v317 = vld [vmem:[%s2] sm:$0xff]
        %v318 = vld [vmem:[%s2 + $0x8] sm:$0xff]
        %v319 = vld [vmem:[%s2 + $0x10] sm:$0xff]
        %321 = vset.pattern.permute.xlu0 0
        %322 = vperm.xlu0 %321, %v317
        %v323 = vpop.permute.xlu0 %322
        %326 = vset.pattern.permute.xlu0 0
        %327 = vperm.xlu0 %326, %v318
        %v328 = vpop.permute.xlu0 %327
        %331 = vset.pattern.permute.xlu0 0
        %332 = vperm.xlu0 %331, %v319
        %v333 = vpop.permute.xlu0 %332
        %v338 = vunpack.c.l.b16 %v309
        %v339 = vunpack.c.l.b16 %v310
        %v340 = vunpack.c.l.b16 %v311
        %v341 = vpack.c.b16 %v339, %v338
        %v342 = vpack.c.b16 %v340, %v340
        %vm343 = vcmask 31744
        %v345 = vsel %vm343, %v341, 0
        %v348 = vsel %vm343, %v342, 0
        %vm350 = vcmask 1041408
        %v352 = vsel %vm350, %v315, 0
        %v355 = vsel %vm350, %v316, 0
        %357 = vmatprep.subr.bf16.mxu0 %v355
        %358 = vmatpush1.bf16.msra.mxu0 %v352
        %359 = vmatprep.subr.bf16.mxu0 0
        %360 = vmatpush1.bf16.msra.mxu0 0
        %361 = vmatprep.subr.bf16.mxu0 0
        %362 = vmatpush1.bf16.msra.mxu0 0
        %363 = vmatprep.subr.bf16.mxu0 0
        %364 = vmatpush1.bf16.msra.mxu0 0
        %365 = vmatprep.subr.bf16.mxu0 0
        %366 = vmatpush1.bf16.msra.mxu0 0
        %367 = vmatprep.subr.bf16.mxu0 0
        %368 = vmatpush1.bf16.msra.mxu0 0
        %369 = vmatprep.subr.bf16.mxu0 0
        %370 = vmatpush1.bf16.msra.mxu0 0
        %371 = vmatprep.subr.bf16.mxu0 0
        %372 = vmatpush1.bf16.msra.mxu0 0
        %373 = vmatprep.subr.bf16.mxu0 0
        %374 = vmatpush1.bf16.msra.mxu0 0
        %375 = vmatprep.subr.bf16.mxu0 0
        %376 = vmatpush1.bf16.msra.mxu0 0
        %377 = vmatprep.subr.bf16.mxu0 0
        %378 = vmatpush1.bf16.msra.mxu0 0
        %379 = vmatprep.subr.bf16.mxu0 0
        %380 = vmatpush1.bf16.msra.mxu0 0
        %381 = vmatprep.subr.bf16.mxu0 0
        %382 = vmatpush1.bf16.msra.mxu0 0
        %383 = vmatprep.subr.bf16.mxu0 0
        %384 = vmatpush1.bf16.msra.mxu0 0
        %385 = vmatprep.subr.bf16.mxu0 0
        %386 = vmatpush1.bf16.msra.mxu0 0
        %387 = vmatprep.subr.bf16.mxu0 0
        %388 = vmatpush1.bf16.msra.mxu0 0
        %389 = vmatprep.mubr.bf16.mxu0 0
        %390 = vmatmul.mubr.bf16.gmra.mrb[0].mxu0 %v345
        %v391 = vpop.f32.mrb[0].mxu0
        %v392 = vadd.f32 %v323, %v391
        %v393 = vpop.f32.mrb[0].mxu0
        %v394 = vadd.f32 %v323, %v393
        %v395 = vpop.f32.mrb[0].mxu0
        %v396 = vadd.f32 %v328, %v395
        %v397 = vpop.f32.mrb[0].mxu0
        %v398 = vadd.f32 %v328, %v397
        %399 = vmatprep.mubr.bf16.mxu0 0
        %400 = vmatmul.mubr.bf16.gmra.mrb[0].mxu0 %v348
        %v401 = vpop.f32.mrb[0].mxu0
        %v402 = vadd.f32 %v333, %v401
        %v403 = vpop.f32.mrb[0].mxu0
        %v404 = vadd.f32 %v333, %v403
        %v405 = vpop.f32.mrb[0].mxu0
        %v406 = vpop.f32.mrb[0].mxu0
        %407 = vdwg.mxu0
        %v408 = vmax.f32 %v392, 0.0
        %v409 = vmax.f32 %v394, 0.0
        %v410 = vmax.f32 %v396, 0.0
        %v411 = vmax.f32 %v398, 0.0
        %v412 = vmax.f32 %v402, 0.0
        %v413 = vmax.f32 %v404, 0.0
        %v414 = vmin.f32 %v408, 6.0
        %v415 = vmin.f32 %v409, 6.0
        %v416 = vmin.f32 %v410, 6.0
        %v417 = vmin.f32 %v411, 6.0
        %v418 = vmin.f32 %v412, 6.0
        %v419 = vmin.f32 %v413, 6.0
        %v420 = vld [vmem:[%s5] ss:$4 sm:$0x3]
        %s421 = scalar_lea.vmem %s5, 1
        %v422 = vld [vmem:[%s421] ss:$4 sm:$0x3]
        %s423 = scalar_lea.vmem %s5, 2
        %v424 = vld [vmem:[%s423] ss:$4 sm:$0x3]
        %s425 = scalar_lea.vmem %s5, 3
        %v426 = vld [vmem:[%s425] ss:$4 sm:$0x3]
        %v427 = vld [vmem:[%s3] sm:$0xff]
        %v428 = vld [vmem:[%s3 + $0x8] sm:$0xff]
        %v429 = vld [vmem:[%s3 + $0x10] sm:$0xff]
        %430 = vrot.lane.b32.xlu0 %v414, 1
        %v431 = vpop.permute.xlu0 %430
        %432 = vrot.lane.b32.xlu0 %v416, 1
        %v433 = vpop.permute.xlu0 %432
        %434 = vrot.lane.b32.xlu0 %v418, 1
        %v435 = vpop.permute.xlu0 %434
        %436 = vrot.lane.b32.xlu0 %v415, 1
        %v437 = vpop.permute.xlu0 %436
        %438 = vrot.lane.b32.xlu0 %v417, 1
        %v439 = vpop.permute.xlu0 %438
        %440 = vrot.lane.b32.xlu0 %v419, 1
        %v441 = vpop.permute.xlu0 %440
        %v442 = vlaneseq
        %v443 = vand.u32 %v442, 127
        %vm444 = vcmp.lt.s32.totalorder %v443, 1
        %v445 = vsel %vm444, %v431, %v437
        %v446 = vsel %vm444, %v433, %v439
        %v447 = vsel %vm444, %v435, %v441
        %v448 = vsel %vm444, %v437, %v431
        %v449 = vsel %vm444, %v439, %v433
        %v450 = vsel %vm444, %v441, %v435
        %v452 = vlaneseq
        %v453 = vshrl.u32 %v452, 7
        %v454 = vsub.s32 0, %v453
        %v455 = vrot.slane %v420, %v454
        %v456 = vlaneseq
        %v457 = vshrl.u32 %v456, 7
        %v458 = vsub.s32 1, %v457
        %v459 = vrot.slane %v420, %v458
        %v462 = vmul.f32 %v448, %v455
        %v463 = vmul.f32 %v445, %v459
        %v464 = vmul.f32 %v449, %v455
        %v465 = vmul.f32 %v446, %v459
        %v466 = vmul.f32 %v450, %v455
        %v467 = vmul.f32 %v447, %v459
        %468 = vrot.lane.b32.xlu0 %v414, 127
        %v469 = vpop.permute.xlu0 %468
        %470 = vrot.lane.b32.xlu0 %v416, 127
        %v471 = vpop.permute.xlu0 %470
        %472 = vrot.lane.b32.xlu0 %v418, 127
        %v473 = vpop.permute.xlu0 %472
        %474 = vrot.lane.b32.xlu0 %v415, 127
        %v475 = vpop.permute.xlu0 %474
        %476 = vrot.lane.b32.xlu0 %v417, 127
        %v477 = vpop.permute.xlu0 %476
        %478 = vrot.lane.b32.xlu0 %v419, 127
        %v479 = vpop.permute.xlu0 %478
        %vm480 = vcmp.lt.s32.totalorder %v443, 127
        %v481 = vsel %vm480, %v469, %v475
        %v482 = vsel %vm480, %v471, %v477
        %v483 = vsel %vm480, %v473, %v479
        %v484 = vsel %vm480, %v475, %v469
        %v485 = vsel %vm480, %v477, %v471
        %v486 = vsel %vm480, %v479, %v473
        %v488 = vlaneseq
        %v489 = vshrl.u32 %v488, 7
        %v490 = vsub.s32 0, %v489
        %v491 = vrot.slane %v422, %v490
        %v492 = vlaneseq
        %v493 = vshrl.u32 %v492, 7
        %v494 = vsub.s32 1, %v493
        %v495 = vrot.slane %v422, %v494
        %v498 = vmul.f32 %v481, %v491
        %v499 = vmul.f32 %v484, %v495
        %v500 = vmul.f32 %v482, %v491
        %v501 = vmul.f32 %v485, %v495
        %v502 = vmul.f32 %v483, %v491
        %v503 = vmul.f32 %v486, %v495
        %505 = vset.pattern.permute.xlu0 0
        %506 = vperm.xlu0 %505, %v427
        %v507 = vpop.permute.xlu0 %506
        %510 = vset.pattern.permute.xlu0 0
        %511 = vperm.xlu0 %510, %v428
        %v512 = vpop.permute.xlu0 %511
        %515 = vset.pattern.permute.xlu0 0
        %516 = vperm.xlu0 %515, %v429
        %v517 = vpop.permute.xlu0 %516
        %v519 = vmul.f32 %v462, %v507
        %v520 = vmul.f32 %v463, %v507
        %v521 = vmul.f32 %v464, %v512
        %v522 = vmul.f32 %v465, %v512
        %v523 = vmul.f32 %v466, %v517
        %v524 = vmul.f32 %v467, %v517
        %525 = vset.pattern.permute.xlu0 1
        %526 = vperm.xlu0 %525, %v427
        %v527 = vpop.permute.xlu0 %526
        %529 = vset.pattern.permute.xlu0 1
        %530 = vperm.xlu0 %529, %v428
        %v531 = vpop.permute.xlu0 %530
        %533 = vset.pattern.permute.xlu0 1
        %534 = vperm.xlu0 %533, %v429
        %v535 = vpop.permute.xlu0 %534
        %v537 = vmul.f32 %v414, %v527
        %v538 = vmul.f32 %v415, %v527
        %v539 = vmul.f32 %v416, %v531
        %v540 = vmul.f32 %v417, %v531
        %v541 = vmul.f32 %v418, %v535
        %v542 = vmul.f32 %v419, %v535
        %v543 = vadd.f32 %v519, %v537
        %v544 = vadd.f32 %v520, %v538
        %v545 = vadd.f32 %v521, %v539
        %v546 = vadd.f32 %v522, %v540
        %v547 = vadd.f32 %v523, %v541
        %v548 = vadd.f32 %v524, %v542
        %549 = vset.pattern.permute.xlu0 2
        %550 = vperm.xlu0 %549, %v427
        %v551 = vpop.permute.xlu0 %550
        %553 = vset.pattern.permute.xlu0 2
        %554 = vperm.xlu0 %553, %v428
        %v555 = vpop.permute.xlu0 %554
        %557 = vset.pattern.permute.xlu0 2
        %558 = vperm.xlu0 %557, %v429
        %v559 = vpop.permute.xlu0 %558
        %v561 = vmul.f32 %v498, %v551
        %v562 = vmul.f32 %v499, %v551
        %v563 = vmul.f32 %v500, %v555
        %v564 = vmul.f32 %v501, %v555
        %v565 = vmul.f32 %v502, %v559
        %v566 = vmul.f32 %v503, %v559
        %v567 = vadd.f32 %v543, %v561
        %v568 = vadd.f32 %v544, %v562
        %v569 = vadd.f32 %v545, %v563
        %v570 = vadd.f32 %v546, %v564
        %v571 = vadd.f32 %v547, %v565
        %v572 = vadd.f32 %v548, %v566
        %573 = vrot.lane.b32.xlu0 %v567, 16
        %v574 = vpop.permute.xlu0 %573
        %575 = vrot.lane.b32.xlu0 %v569, 16
        %v576 = vpop.permute.xlu0 %575
        %577 = vrot.lane.b32.xlu0 %v571, 16
        %v578 = vpop.permute.xlu0 %577
        %579 = vrot.lane.b32.xlu0 %v568, 16
        %v580 = vpop.permute.xlu0 %579
        %581 = vrot.lane.b32.xlu0 %v570, 16
        %v582 = vpop.permute.xlu0 %581
        %583 = vrot.lane.b32.xlu0 %v572, 16
        %v584 = vpop.permute.xlu0 %583
        %vm585 = vcmp.lt.s32.totalorder %v443, 16
        %v586 = vsel %vm585, %v574, %v580
        %v587 = vsel %vm585, %v576, %v582
        %v588 = vsel %vm585, %v578, %v584
        %v589 = vsel %vm585, %v580, %v574
        %v590 = vsel %vm585, %v582, %v576
        %v591 = vsel %vm585, %v584, %v578
        %v593 = vlaneseq
        %v594 = vshrl.u32 %v593, 7
        %v595 = vsub.s32 0, %v594
        %v596 = vrot.slane %v424, %v595
        %v597 = vlaneseq
        %v598 = vshrl.u32 %v597, 7
        %v599 = vsub.s32 1, %v598
        %v600 = vrot.slane %v424, %v599
        %v603 = vmul.f32 %v589, %v596
        %v604 = vmul.f32 %v586, %v600
        %v605 = vmul.f32 %v590, %v596
        %v606 = vmul.f32 %v587, %v600
        %v607 = vmul.f32 %v591, %v596
        %v608 = vmul.f32 %v588, %v600
        %609 = vset.pattern.permute.xlu0 3
        %610 = vperm.xlu0 %609, %v427
        %v611 = vpop.permute.xlu0 %610
        %613 = vset.pattern.permute.xlu0 3
        %614 = vperm.xlu0 %613, %v428
        %v615 = vpop.permute.xlu0 %614
        %617 = vset.pattern.permute.xlu0 3
        %618 = vperm.xlu0 %617, %v429
        %v619 = vpop.permute.xlu0 %618
        %v621 = vmul.f32 %v462, %v611
        %v622 = vmul.f32 %v463, %v611
        %v623 = vmul.f32 %v464, %v615
        %v624 = vmul.f32 %v465, %v615
        %v625 = vmul.f32 %v466, %v619
        %v626 = vmul.f32 %v467, %v619
        %627 = vset.pattern.permute.xlu0 4
        %628 = vperm.xlu0 %627, %v427
        %v629 = vpop.permute.xlu0 %628
        %631 = vset.pattern.permute.xlu0 4
        %632 = vperm.xlu0 %631, %v428
        %v633 = vpop.permute.xlu0 %632
        %635 = vset.pattern.permute.xlu0 4
        %636 = vperm.xlu0 %635, %v429
        %v637 = vpop.permute.xlu0 %636
        %v639 = vmul.f32 %v414, %v629
        %v640 = vmul.f32 %v415, %v629
        %v641 = vmul.f32 %v416, %v633
        %v642 = vmul.f32 %v417, %v633
        %v643 = vmul.f32 %v418, %v637
        %v644 = vmul.f32 %v419, %v637
        %v645 = vadd.f32 %v621, %v639
        %v646 = vadd.f32 %v622, %v640
        %v647 = vadd.f32 %v623, %v641
        %v648 = vadd.f32 %v624, %v642
        %v649 = vadd.f32 %v625, %v643
        %v650 = vadd.f32 %v626, %v644
        %651 = vset.pattern.permute.xlu0 5
        %652 = vperm.xlu0 %651, %v427
        %v653 = vpop.permute.xlu0 %652
        %655 = vset.pattern.permute.xlu0 5
        %656 = vperm.xlu0 %655, %v428
        %v657 = vpop.permute.xlu0 %656
        %659 = vset.pattern.permute.xlu0 5
        %660 = vperm.xlu0 %659, %v429
        %v661 = vpop.permute.xlu0 %660
        %v663 = vmul.f32 %v498, %v653
        %v664 = vmul.f32 %v499, %v653
        %v665 = vmul.f32 %v500, %v657
        %v666 = vmul.f32 %v501, %v657
        %v667 = vmul.f32 %v502, %v661
        %v668 = vmul.f32 %v503, %v661
        %v669 = vadd.f32 %v645, %v663
        %v670 = vadd.f32 %v646, %v664
        %v671 = vadd.f32 %v647, %v665
        %v672 = vadd.f32 %v648, %v666
        %v673 = vadd.f32 %v649, %v667
        %v674 = vadd.f32 %v650, %v668
        %v675 = vadd.f32 %v603, %v669
        %v676 = vadd.f32 %v604, %v670
        %v677 = vadd.f32 %v605, %v671
        %v678 = vadd.f32 %v606, %v672
        %v679 = vadd.f32 %v607, %v673
        %v680 = vadd.f32 %v608, %v674
        %681 = vset.pattern.permute.xlu0 6
        %682 = vperm.xlu0 %681, %v427
        %v683 = vpop.permute.xlu0 %682
        %685 = vset.pattern.permute.xlu0 6
        %686 = vperm.xlu0 %685, %v428
        %v687 = vpop.permute.xlu0 %686
        %689 = vset.pattern.permute.xlu0 6
        %690 = vperm.xlu0 %689, %v429
        %v691 = vpop.permute.xlu0 %690
        %v693 = vmul.f32 %v462, %v683
        %v694 = vmul.f32 %v463, %v683
        %v695 = vmul.f32 %v464, %v687
        %v696 = vmul.f32 %v465, %v687
        %v697 = vmul.f32 %v466, %v691
        %v698 = vmul.f32 %v467, %v691
        %699 = vset.pattern.permute.xlu0 7
        %700 = vperm.xlu0 %699, %v427
        %v701 = vpop.permute.xlu0 %700
        %703 = vset.pattern.permute.xlu0 7
        %704 = vperm.xlu0 %703, %v428
        %v705 = vpop.permute.xlu0 %704
        %707 = vset.pattern.permute.xlu0 7
        %708 = vperm.xlu0 %707, %v429
        %v709 = vpop.permute.xlu0 %708
        %v711 = vmul.f32 %v414, %v701
        %v712 = vmul.f32 %v415, %v701
        %v713 = vmul.f32 %v416, %v705
        %v714 = vmul.f32 %v417, %v705
        %v715 = vmul.f32 %v418, %v709
        %v716 = vmul.f32 %v419, %v709
        %v717 = vadd.f32 %v693, %v711
        %v718 = vadd.f32 %v694, %v712
        %v719 = vadd.f32 %v695, %v713
        %v720 = vadd.f32 %v696, %v714
        %v721 = vadd.f32 %v697, %v715
        %v722 = vadd.f32 %v698, %v716
        %723 = vset.pattern.permute.xlu0 8
        %724 = vperm.xlu0 %723, %v427
        %v725 = vpop.permute.xlu0 %724
        %727 = vset.pattern.permute.xlu0 8
        %728 = vperm.xlu0 %727, %v428
        %v729 = vpop.permute.xlu0 %728
        %731 = vset.pattern.permute.xlu0 8
        %732 = vperm.xlu0 %731, %v429
        %v733 = vpop.permute.xlu0 %732
        %v735 = vmul.f32 %v498, %v725
        %v736 = vmul.f32 %v499, %v725
        %v737 = vmul.f32 %v500, %v729
        %v738 = vmul.f32 %v501, %v729
        %v739 = vmul.f32 %v502, %v733
        %v740 = vmul.f32 %v503, %v733
        %v741 = vadd.f32 %v717, %v735
        %v742 = vadd.f32 %v718, %v736
        %v743 = vadd.f32 %v719, %v737
        %v744 = vadd.f32 %v720, %v738
        %v745 = vadd.f32 %v721, %v739
        %v746 = vadd.f32 %v722, %v740
        %747 = vrot.lane.b32.xlu0 %v741, 112
        %v748 = vpop.permute.xlu0 %747
        %749 = vrot.lane.b32.xlu0 %v743, 112
        %v750 = vpop.permute.xlu0 %749
        %751 = vrot.lane.b32.xlu0 %v745, 112
        %v752 = vpop.permute.xlu0 %751
        %753 = vrot.lane.b32.xlu0 %v742, 112
        %v754 = vpop.permute.xlu0 %753
        %755 = vrot.lane.b32.xlu0 %v744, 112
        %v756 = vpop.permute.xlu0 %755
        %757 = vrot.lane.b32.xlu0 %v746, 112
        %v758 = vpop.permute.xlu0 %757
        %vm759 = vcmp.lt.s32.totalorder %v443, 112
        %v760 = vsel %vm759, %v748, %v754
        %v761 = vsel %vm759, %v750, %v756
        %v762 = vsel %vm759, %v752, %v758
        %v763 = vsel %vm759, %v754, %v748
        %v764 = vsel %vm759, %v756, %v750
        %v765 = vsel %vm759, %v758, %v752
        %v767 = vlaneseq
        %v768 = vshrl.u32 %v767, 7
        %v769 = vsub.s32 0, %v768
        %v770 = vrot.slane %v426, %v769
        %v771 = vlaneseq
        %v772 = vshrl.u32 %v771, 7
        %v773 = vsub.s32 1, %v772
        %v774 = vrot.slane %v426, %v773
        %v777 = vmul.f32 %v760, %v770
        %v778 = vmul.f32 %v763, %v774
        %v779 = vmul.f32 %v761, %v770
        %v780 = vmul.f32 %v764, %v774
        %v781 = vmul.f32 %v762, %v770
        %v782 = vmul.f32 %v765, %v774
        %v783 = vadd.f32 %v675, %v777
        %v784 = vadd.f32 %v676, %v778
        %v785 = vadd.f32 %v677, %v779
        %v786 = vadd.f32 %v678, %v780
        %v787 = vadd.f32 %v679, %v781
        %v788 = vadd.f32 %v680, %v782
        %v789 = vld [vmem:[%s4] sm:$0xff]
        %v790 = vld [vmem:[%s4 + $0x8] sm:$0xff]
        %v791 = vld [vmem:[%s4 + $0x10] sm:$0xff]
        %793 = vset.pattern.permute.xlu0 0
        %794 = vperm.xlu0 %793, %v789
        %v795 = vpop.permute.xlu0 %794
        %798 = vset.pattern.permute.xlu0 0
        %799 = vperm.xlu0 %798, %v790
        %v800 = vpop.permute.xlu0 %799
        %803 = vset.pattern.permute.xlu0 0
        %804 = vperm.xlu0 %803, %v791
        %v805 = vpop.permute.xlu0 %804
        %v807 = vadd.f32 %v783, %v795
        %v808 = vadd.f32 %v784, %v795
        %v809 = vadd.f32 %v785, %v800
        %v810 = vadd.f32 %v786, %v800
        %v811 = vadd.f32 %v787, %v805
        %v812 = vadd.f32 %v788, %v805
        %v813 = vmax.f32 %v807, 0.0
        %v814 = vmax.f32 %v808, 0.0
        %v815 = vmax.f32 %v809, 0.0
        %v816 = vmax.f32 %v810, 0.0
        %v817 = vmax.f32 %v811, 0.0
        %v818 = vmax.f32 %v812, 0.0
        %v819 = vmin.f32 %v813, 6.0
        %v820 = vmin.f32 %v814, 6.0
        %v821 = vmin.f32 %v815, 6.0
        %v822 = vmin.f32 %v816, 6.0
        %v823 = vmin.f32 %v817, 6.0
        %v824 = vmin.f32 %v818, 6.0
        %v825 = vld [vmem:[%s6] sm:$0x3]
        %v826 = vpack.c.bf16 %v821, %v819
        %v827 = vpack.c.bf16 %v822, %v820
        %v828 = vpack.c.bf16 %v823, %v823
        %v829 = vpack.c.bf16 %v824, %v824
        %v830 = vld [vmem:[%s7] sm:$0xf]
        %832 = vset.pattern.permute.xlu0 0
        %833 = vperm.xlu0 %832, %v830
        %v834 = vpop.permute.xlu0 %833
        %vm836 = vcmask 195584
        %v838 = vsel %vm836, %v825, 0
        %vm840 = vcmask 1043456
        %v842 = vsel %vm840, %v828, 0
        %v845 = vsel %vm840, %v829, 0
        %847 = vmatprep.subr.bf16.mxu0 %v827
        %848 = vmatpush1.bf16.msra.mxu0 %v826
        %849 = vmatprep.subr.bf16.mxu0 %v845
        %850 = vmatpush1.bf16.msra.mxu0 %v842
        %851 = vmatprep.subr.bf16.mxu0 0
        %852 = vmatpush1.bf16.msra.mxu0 0
        %853 = vmatprep.subr.bf16.mxu0 0
        %854 = vmatpush1.bf16.msra.mxu0 0
        %855 = vmatprep.subr.bf16.mxu0 0
        %856 = vmatpush1.bf16.msra.mxu0 0
        %857 = vmatprep.subr.bf16.mxu0 0
        %858 = vmatpush1.bf16.msra.mxu0 0
        %859 = vmatprep.subr.bf16.mxu0 0
        %860 = vmatpush1.bf16.msra.mxu0 0
        %861 = vmatprep.subr.bf16.mxu0 0
        %862 = vmatpush1.bf16.msra.mxu0 0
        %863 = vmatprep.subr.bf16.mxu0 0
        %864 = vmatpush1.bf16.msra.mxu0 0
        %865 = vmatprep.subr.bf16.mxu0 0
        %866 = vmatpush1.bf16.msra.mxu0 0
        %867 = vmatprep.subr.bf16.mxu0 0
        %868 = vmatpush1.bf16.msra.mxu0 0
        %869 = vmatprep.subr.bf16.mxu0 0
        %870 = vmatpush1.bf16.msra.mxu0 0
        %871 = vmatprep.subr.bf16.mxu0 0
        %872 = vmatpush1.bf16.msra.mxu0 0
        %873 = vmatprep.subr.bf16.mxu0 0
        %874 = vmatpush1.bf16.msra.mxu0 0
        %875 = vmatprep.subr.bf16.mxu0 0
        %876 = vmatpush1.bf16.msra.mxu0 0
        %877 = vmatprep.subr.bf16.mxu0 0
        %878 = vmatpush1.bf16.msra.mxu0 0
        %879 = vmatprep.mubr.bf16.mxu0 0
        %880 = vmatmul.mubr.bf16.gmra.mrb[0].mxu0 %v838
        %v881 = vpop.f32.mrb[0].mxu0
        %v882 = vadd.f32 %v834, %v881
        %v883 = vpop.f32.mrb[0].mxu0
        %v884 = vadd.f32 %v834, %v883
        %v885 = vpop.f32.mrb[0].mxu0
        %v886 = vpop.f32.mrb[0].mxu0
        %887 = vdwg.mxu0
        %v888 = vadd.f32 %v882, %v308
        %v889 = vadd.f32 %v884, %v313
        %v892 = vcombine.low %v888, %v889
        %894 = vst [vmem:[%s299] sm:$0xff] %v892
        %s895 = sand.u32 %s203, 1
        %s896 = scalar_lea.sflag [#allocation3], %s895
        %s897 = sand.u32 %s203, 1
        %s898 = smul.addr %s897, 8
        %s899 = scalar_lea.vmem [#allocation2], %s898
        // Predicated region
        $region53: #{tpu_custom_call.1} parent=51 // pred_check
          %p900 = pneg %p213
        $region54: #{tpu_custom_call.1} parent=51 // pred_check_branch
          %902 = sbr.rel (%p900) target = $region56
        $region55: #{tpu_custom_call.1} parent=51 // pred_region
          %s903 = smul.u32 2, %s22
          %s905 = ssub.s32 128, 128
          %906 = vsyncadd %s896, %s905
          %s907 = smul.addr %s903, 64
          %s908 = scalar_lea.hbm %s8, %s907
          %s910 = sshll.u32 %s899, 4
          %s911 = int_to_ptr.vmem [resolvable:$true] %s910
          %913 = dma.vmem_to_hbm [thread:$0]  %s911, 128, %s908, %s896
        $region56: #{tpu_custom_call.1} parent=51 // pred_fallthru
          _
      $region52: #{tpu_custom_call.1} parent=5 // pred_fallthru
        _
      %p914 = scmp.le.s32.totalorder 2, %s17
      // Predicated region
      $region57: #{tpu_custom_call.1} parent=5 // pred_check
        %p915 = pneg %p914
      $region58: #{tpu_custom_call.1} parent=5 // pred_check_branch
        %917 = sbr.rel (%p915) target = $region60
      $region59: #{tpu_custom_call.1} parent=5 // pred_region
        %s918 = ssub.s32 %s17, 2
        // Predicated region
        $region61: #{tpu_custom_call.1} parent=59 // pred_check
          %p919 = pneg %p219
        $region62: #{tpu_custom_call.1} parent=59 // pred_check_branch
          %921 = sbr.rel (%p919) target = $region64
        $region63: #{tpu_custom_call.1} parent=59 // pred_region
          %s922 = sand.u32 %s204, 1
          %s923 = scalar_lea.sflag [#allocation3], %s922
          %s924 = sand.u32 %s204, 1
          %s925 = smul.addr %s924, 8
          %s926 = scalar_lea.vmem [#allocation2], %s925
          %927 = dma.done %s923, 128
        $region64: #{tpu_custom_call.1} parent=59 // pred_fallthru
          _
      $region60: #{tpu_custom_call.1} parent=5 // pred_fallthru
        _
    $region6: #{tpu_custom_call.1} parent=1 // loop_footer
      %s21 = sadd.s32 1, %s17
    $region7: #{tpu_custom_call.1} parent=1 // loop_footer_branch
      %16 = sbr.rel target = $region3
    $region8: #{tpu_custom_call.1} parent=1 // loop_exit
      _
    %928 = vsyncpa [#allocation3], 1
    %s929 = scalar_lea.sflag [#allocation3], 1
    %930 = vsyncpa %s929, 1

</llo_original>
